<compile_context>
chip_gen: v6e
topology: v6e:2x2x1
jax: 0.10.0
libtpu: 0.0.40
codegen_flags: <defaults>
</compile_context>

<pallas_src>
import functools
import math

import jax
import jax.numpy as jnp
from jax.experimental import pallas as pl
from jax.experimental.pallas import tpu as pltpu


_ACTIVATIONS = {
    "relu": lambda y: jnp.maximum(y, 0.0),
    # PyTorch nn.GELU defaults to the exact erf form.
    "gelu": lambda y: jax.nn.gelu(y, approximate=False),
    "gelu_tanh": lambda y: jax.nn.gelu(y, approximate=True),
    "tanh": jnp.tanh,
    "sigmoid": jax.nn.sigmoid,
    "identity": lambda y: y,
}
_TRANSCENDENTAL_ACTS = frozenset({"gelu", "gelu_tanh", "tanh", "sigmoid"})


def _round_up(v, m):
    return (v + m - 1) // m * m


@functools.lru_cache(maxsize=1)
def _vmem_capacity_bytes():
    """Per-core VMEM capacity; conservative 64 MiB fallback (v7x per-TC)."""
    try:
        return int(pltpu.get_tpu_info().vmem_capacity_bytes)
    except Exception:
        return 64 << 20


def _default_tiles(vmem_cap):
    if vmem_cap >= (96 << 20):
        # v5e / v6e: 128 MiB VMEM -> go big so the MXU, not HBM, is the roofline.
        return 1024, 512, 1024
    # v7x: 64 MiB VMEM per TensorCore.
    return 512, 512, 1024


def _kn_plan(K, N, tile_n, tile_k):
    """Shared K/N tiling plan so prepare_ffn_params and the wrapper agree."""
    cap = _vmem_capacity_bytes()
    _, dtn, dtk = _default_tiles(cap)
    tile_n = dtn if tile_n is None else tile_n
    tile_k = dtk if tile_k is None else tile_k
    tn = min(tile_n, _round_up(N, 128))
    tk = min(tile_k, _round_up(K, 128))
    return tn, tk, _round_up(N, tn), _round_up(K, tk), cap


def prepare_ffn_params(w, b, *, tile_n=None, tile_k=None,
                       compute_dtype=jnp.bfloat16):
    """One-time (parameter-init-time) pad + cast of the Linear parameters.

    w: [in_features, out_features]  (transpose of PyTorch's [out, in] weight)
    b: [out_features]
    Returns (w_padded [Kp, Np] in compute_dtype, b_padded [1, Np] f32).
    Pass the result to feed_forward_layer with out_features=<original N> so
    the hot path never re-pads / re-casts the weight.
    """
    K, N = w.shape
    _, _, Np, Kp, _ = _kn_plan(K, N, tile_n, tile_k)
    if (K, N) != (Kp, Np):
        w = jnp.pad(w, ((0, Kp - K), (0, Np - N)))
    w = w.astype(compute_dtype)
    if N != Np:
        b = jnp.pad(b, (0, Np - N))
    return w, b.astype(jnp.float32).reshape(1, Np)


def _make_ffn_kernel_2d(activation_fn, compute_dtype):
    """Full-K path: one dot per output tile, no reduction grid axis."""
    def kernel(x_ref, w_ref, b_ref, o_ref):
        y = jnp.dot(
            x_ref[...].astype(compute_dtype),  # in-kernel cast (VPU, hidden under MXU)
            w_ref[...],
            preferred_element_type=jnp.float32,
        )
        y = y + b_ref[...]                     # (1, tn) broadcasts over rows
        o_ref[...] = activation_fn(y).astype(o_ref.dtype)
    return kernel


def _make_ffn_kernel_3d(activation_fn, compute_dtype):
    """K-reduction path: f32 VMEM accumulator, init/finalize via pl.when."""
    def kernel(x_ref, w_ref, b_ref, o_ref, acc_ref):
        @pl.when(pl.program_id(2) == 0)
        def _():
            acc_ref[...] = jnp.zeros_like(acc_ref)

        acc_ref[...] += jnp.dot(
            x_ref[...].astype(compute_dtype),
            w_ref[...],
            preferred_element_type=jnp.float32,
        )

        @pl.when(pl.program_id(2) == pl.num_programs(2) - 1)
        def _():
            y = acc_ref[...] + b_ref[...]
            o_ref[...] = activation_fn(y).astype(o_ref.dtype)
    return kernel


@functools.partial(
    jax.jit,
    static_argnames=("out_features", "tile_m", "tile_n", "tile_k",
                     "compute_dtype", "out_dtype", "activation"),
)
def feed_forward_layer(x, w, b, *, out_features=None, tile_m=None, tile_n=None,
                       tile_k=None, compute_dtype=jnp.bfloat16, out_dtype=None,
                       activation="relu"):
    """y = activation(x @ w + b); dropout is identity (inference mode).

    x: [..., in_features]
    w: raw [in_features, out_features], or pre-padded/cast via prepare_ffn_params
    b: raw [out_features], or [1, Np] from prepare_ffn_params
    out_features: required (for output slicing) when w/b are pre-padded.
    """
    *lead, K = x.shape
    M = math.prod(lead)
    x2 = x.reshape(M, K)

    compute_dtype = jnp.dtype(compute_dtype)
    out_dtype = x.dtype if out_dtype is None else jnp.dtype(out_dtype)

    # Logical output width (needed to slice padding off when w is pre-padded).
    N = int(out_features) if out_features is not None else int(w.shape[1])

    tn, tk, Np, Kp, vmem_cap = _kn_plan(K, N, tile_n, tile_k)
    dtm, _, _ = _default_tiles(vmem_cap)
    tile_m = dtm if tile_m is None else tile_m
    # Align the row tile to the compute-dtype sublane packing (16 rows for bf16).
    sub = 8 * max(1, 4 // compute_dtype.itemsize)
    tm = min(tile_m, _round_up(M, sub))
    Mp = _round_up(M, tm)

    xbytes = x.dtype.itemsize
    cbytes = compute_dtype.itemsize
    obytes = jnp.dtype(out_dtype).itemsize

    # --- Parameters: pad / cast only if the caller did not use prepare_ffn_params.
    if w.shape != (Kp, Np):
        if w.shape != (K, N):
            raise ValueError(f"weight shape {w.shape} matches neither raw "
                             f"({K},{N}) nor padded ({Kp},{Np})")
        w = jnp.pad(w, ((0, Kp - K), (0, Np - N)))
    if w.dtype != compute_dtype:
        w = w.astype(compute_dtype)

    if b.ndim == 1:
        if b.shape[0] != Np:
            b = jnp.pad(b, (0, Np - b.shape[0]))
        b = b.reshape(1, Np)
    if b.shape != (1, Np):
        raise ValueError(f"bias shape {b.shape} != (1, {Np})")
    if b.dtype != jnp.float32:
        b = b.astype(jnp.float32)

    # --- Activations: pad only if needed; keep storage dtype and cast to
    # compute_dtype *inside* the kernel (saves one HBM pass over x).
    if (M, K) != (Mp, Kp):
        x2 = jnp.pad(x2, ((0, Mp - M), (0, Kp - K)))

    activation_fn = _ACTIVATIONS[activation]
    transcendentals = Mp * Np if activation in _TRANSCENDENTAL_ACTS else 0
    flops = 2 * Mp * Np * Kp

    # --- Full-K (2-D grid) fast path: grid is N-outer / M-inner so the (K, tn)
    # weight panel's block index is constant across the inner M sweep and is
    # DMA'd from HBM exactly once.
    full_k_working = (
        2 * tm * Kp * xbytes        # x blocks, double buffered
        + 2 * Kp * tn * cbytes      # weight panel
        + 2 * tn * 4                # bias
        + 2 * tm * tn * obytes      # output
        + tm * tn * 4               # f32 intermediate
    )
    use_full_k = full_k_working <= int(0.7 * vmem_cap)

    if use_full_k:
        working = full_k_working
        grid = (Np // tn, Mp // tm)
        kernel = _make_ffn_kernel_2d(activation_fn, compute_dtype)
        grid_spec = pltpu.PrefetchScalarGridSpec(
            num_scalar_prefetch=0,
            grid=grid,
            in_specs=[
                pl.BlockSpec((tm, Kp), lambda j, i: (i, 0)),   # x rows, full K
                pl.BlockSpec((Kp, tn), lambda j, i: (0, j)),   # weight panel (resident per j)
                pl.BlockSpec((1, tn), lambda j, i: (0, j)),    # bias slice
            ],
            out_specs=pl.BlockSpec((tm, tn), lambda j, i: (i, j)),
            scratch_shapes=(),
        )
        dim_sem = ("parallel", "parallel")
        bytes_accessed = (
            (Np // tn) * Mp * Kp * xbytes    # x re-streamed once per N tile
            + Kp * Np * cbytes               # weight read exactly once
            + Np * 4
            + Mp * Np * obytes
        )
    else:
        working = (
            2 * (tm * tk * xbytes + tk * tn * cbytes)
            + 2 * tn * 4
            + 2 * tm * tn * obytes
            + tm * tn * 4                    # f32 accumulator
        )
        grid = (Mp // tm, Np // tn, Kp // tk)
        kernel = _make_ffn_kernel_3d(activation_fn, compute_dtype)
        grid_spec = pltpu.PrefetchScalarGridSpec(
            num_scalar_prefetch=0,
            grid=grid,
            in_specs=[
                pl.BlockSpec((tm, tk), lambda i, j, k: (i, k)),   # x row/K panel
                # TODO(synk): if profiles show an exposed DMA bubble at (i, j)
                # transitions, add pipeline_mode=pl.Buffered(3) on this spec.
                pl.BlockSpec((tk, tn), lambda i, j, k: (k, j)),   # weight panel
                pl.BlockSpec((1, tn), lambda i, j, k: (0, j)),    # bias slice
            ],
            out_specs=pl.BlockSpec((tm, tn), lambda i, j, k: (i, j)),
            scratch_shapes=[pltpu.VMEM((tm, tn), jnp.float32)],
        )
        dim_sem = ("parallel", "parallel", "arbitrary")
        bytes_accessed = (
            (Np // tn) * Mp * Kp * xbytes    # x re-streamed once per N tile
            + (Mp // tm) * Kp * Np * cbytes  # weight re-streamed once per M tile
            + Np * 4
            + Mp * Np * obytes
        )

    # Generation-aware VMEM budget: enough for the working set + headroom,
    # capped at 85% of the queried per-core capacity.
    vmem_limit = min(max(working + (16 << 20), 32 << 20), int(0.85 * vmem_cap))
    vmem_limit = int(max(vmem_limit, working + (2 << 20)))

    out = pl.pallas_call(
        kernel,
        out_shape=jax.ShapeDtypeStruct((Mp, Np), out_dtype),
        grid_spec=grid_spec,
        compiler_params=pltpu.CompilerParams(
            dimension_semantics=dim_sem,
            vmem_limit_bytes=vmem_limit,
        ),
        cost_estimate=pl.CostEstimate(
            flops=flops,
            transcendentals=transcendentals,
            bytes_accessed=bytes_accessed,
        ),
    )(x2, w, b)

    return out[:M, :N].reshape(*lead, N)


if __name__ == "__main__":
    # Small, module-consistent shapes: batch=2, seq=8, input_size=32, output_size=64.
    batch, seq, input_size, output_size = 2, 8, 32, 64

    key = jax.random.PRNGKey(0)
    kx, kw, kb = jax.random.split(key, 3)

    # Deterministic init mimicking nn.Linear's U(-1/sqrt(in), 1/sqrt(in)).
    bound = 1.0 / (input_size ** 0.5)
    w = jax.random.uniform(kw, (input_size, output_size), jnp.float32, -bound, bound)
    b = jax.random.uniform(kb, (output_size,), jnp.float32, -bound, bound)
    x = jax.random.normal(kx, (batch, seq, input_size), jnp.float32)

    # Hot-path usage: pad / cast the weight once ("parameter init" time).
    wp, bp = prepare_ffn_params(w, b)
    y = feed_forward_layer(x, wp, bp, out_features=output_size, activation="relu")
    y = jax.block_until_ready(y)

    # Raw-parameter path (wrapper does the conditional pad / cast) must agree.
    y_raw = feed_forward_layer(x, w, b, activation="relu")
    y_raw = jax.block_until_ready(y_raw)

    # Pure-JAX reference with the same bf16 operand rounding / f32 accumulation.
    y_ref = jnp.maximum(
        jnp.dot(
            x.astype(jnp.bfloat16),
            w.astype(jnp.bfloat16),
            preferred_element_type=jnp.float32,
        )
        + b,
        0.0,
    )

    assert y.shape == (batch, seq, output_size)
    assert y_raw.shape == (batch, seq, output_size)
    assert jnp.allclose(y, y_ref, atol=1e-2, rtol=1e-2), float(jnp.max(jnp.abs(y - y_ref)))
    assert jnp.allclose(y_raw, y_ref, atol=1e-2, rtol=1e-2), float(jnp.max(jnp.abs(y_raw - y_ref)))

    print("KERNEL_OK")
</pallas_src>

<mosaic_0001>
module attributes {stable_mosaic.version = 11 : i64} {
  func.func @kernel(%arg0: i32, %arg1: i32, %arg2: memref<16x128xf32, #tpu.memory_space<vmem>>, %arg3: memref<128x128xbf16, #tpu.memory_space<vmem>>, %arg4: memref<1x128xf32, #tpu.memory_space<vmem>>, %arg5: memref<16x128xf32, #tpu.memory_space<vmem>>) attributes {dimension_semantics = [#tpu.dimension_semantics<parallel>, #tpu.dimension_semantics<parallel>], iteration_bounds = array<i64: 1, 1>, scalar_prefetch = 0 : i64, scratch_operands = 0 : i64, tpu.core_type = #tpu.core_type<tc>, window_params = [{transform_indices = @transform_0, window_bounds = array<i64: 16, 128>}, {transform_indices = @transform_1, window_bounds = array<i64: 128, 128>}, {transform_indices = @transform_2, window_bounds = array<i64: 1, 128>}, {transform_indices = @transform_3, window_bounds = array<i64: 16, 128>}]} {
    %c0 = arith.constant 0 : index
    %c0_0 = arith.constant 0 : index
    %0 = vector.load %arg2[%c0, %c0_0] : memref<16x128xf32, #tpu.memory_space<vmem>>, vector<16x128xf32>
    %1 = arith.truncf %0 : vector<16x128xf32> to vector<16x128xbf16>
    %c0_1 = arith.constant 0 : index
    %c0_2 = arith.constant 0 : index
    %2 = vector.load %arg3[%c0_1, %c0_2] : memref<128x128xbf16, #tpu.memory_space<vmem>>, vector<128x128xbf16>
    %cst = arith.constant dense<0.000000e+00> : vector<16x128xf32>
    %3 = tpu.matmul %1, %2, %cst {dimension_numbers = #tpu.dot_dimension_numbers<[1], [0], [0], [1], [0, 0, 1, 1], [], []>} : vector<16x128xbf16>, vector<128x128xbf16>, vector<16x128xf32> -> vector<16x128xf32>
    %c0_3 = arith.constant 0 : index
    %c0_4 = arith.constant 0 : index
    %4 = vector.load %arg4[%c0_3, %c0_4] : memref<1x128xf32, #tpu.memory_space<vmem>>, vector<1x128xf32>
    %5 = vector.broadcast %4 : vector<1x128xf32> to vector<16x128xf32>
    %6 = arith.addf %3, %5 : vector<16x128xf32>
    %cst_5 = arith.constant 0.000000e+00 : f32
    %7 = vector.broadcast %cst_5 : f32 to vector<16x128xf32>
    %8 = arith.maximumf %6, %7 : vector<16x128xf32>
    %c0_6 = arith.constant 0 : index
    %c0_7 = arith.constant 0 : index
    %9 = vector.load %arg5[%c0_6, %c0_7] : memref<16x128xf32, #tpu.memory_space<vmem>>, vector<16x128xf32>
    tpu.vector_store %arg5[%c0_6, %c0_7], %8 {strides = array<i32>} : memref<16x128xf32, #tpu.memory_space<vmem>>, vector<16x128xf32>,
    return
  }
  func.func @transform_0(%arg0: i32, %arg1: i32) -> (i32, i32) {
    %c0_i32 = arith.constant 0 : i32
    %c0_i32_0 = arith.constant 0 : i32
    return %arg1, %c0_i32 : i32, i32
  }
  func.func @transform_1(%arg0: i32, %arg1: i32) -> (i32, i32) {
    %c0_i32 = arith.constant 0 : i32
    %c0_i32_0 = arith.constant 0 : i32
    return %c0_i32, %arg0 : i32, i32
  }
  func.func @transform_2(%arg0: i32, %arg1: i32) -> (i32, i32) {
    %c0_i32 = arith.constant 0 : i32
    %c0_i32_0 = arith.constant 0 : i32
    return %c0_i32, %arg0 : i32, i32
  }
  func.func @transform_3(%arg0: i32, %arg1: i32) -> (i32, i32) {
    %c0_i32 = arith.constant 0 : i32
    return %arg1, %arg0 : i32, i32
  }
}

</mosaic_0001>

<llo_original>
// kernel: feed_forward_layer.1
$region0: #{feed_forward_layer.1}
  #allocation0 [shape = 'u32[]', space=smem, size = 0x4, offset = 0x4, fixed_abs, tag = 'smem constant byte address 0x4 - core index']
  #allocation1 [shape = 'u32[144,128]{1,0:T(1,128)}', space=vmem, size = 0x12000, scoped, tag = 'internal scratch']
  %s0 = inlined_call_operand.vmem [shape: f32[16,128], index: 0, kind: input, shape index: {}]
  %s1 = inlined_call_operand.hbm [shape: bf16[128,128], index: 1, kind: input, shape index: {}]
  %s2 = inlined_call_operand.vmem [shape: f32[1,128], index: 2, kind: input, shape index: {}]
  %s3 = inlined_call_operand.vmem [shape: f32[16,128], index: 3, kind: output, shape index: {}]
  %s4 = sld [smem:[#allocation0]]
  $region26: #{feed_forward_layer.1} parent=0
    _
  %s6 = ssub.s32 1, %s4
  %s7 = scalar_select 0, %s6, %s4
  $region1: #{feed_forward_layer.1} parent=0
    #allocation2 [shape = 'u8[32768]{0}', space=vmem, size = 0x8000, scoped, tag = 'input window, operand 1, single buffered']
    #allocation3 [shape = 's32[1]{0}', space=sflag, size = 0x4, scoped, tag = 'scoped memory for feed_forward_layer.1']
    %8 = vsyncpa [#allocation3], 0
    // Predicated region
    $region2: #{feed_forward_layer.1} parent=1 // pred_check
      _
    $region3: #{feed_forward_layer.1} parent=1 // pred_check_branch
      %10 = sbr.rel (0) target = $region5
    $region4: #{feed_forward_layer.1} parent=1 // pred_region
      _
    $region5: #{feed_forward_layer.1} parent=1 // pred_fallthru
      _
    // Predicated region
    $region6: #{feed_forward_layer.1} parent=1 // pred_check
      _
    $region7: #{feed_forward_layer.1} parent=1 // pred_check_branch
      %12 = sbr.rel (0) target = $region9
    $region8: #{feed_forward_layer.1} parent=1 // pred_region
      %s14 = ssub.s32 1024, 1024
      %15 = vsyncadd [#allocation3], %s14
      %s16 = sshll.u32 [#allocation2], 4
      %s17 = int_to_ptr.vmem [resolvable:$true] %s16
      %22 = dma.hbm_to_vmem [thread:$0]  %s1, 1024, %s17, [#allocation3], 64, 64, 4
    $region9: #{feed_forward_layer.1} parent=1 // pred_fallthru
      _
    // Predicated region
    $region10: #{feed_forward_layer.1} parent=1 // pred_check
      _
    $region11: #{feed_forward_layer.1} parent=1 // pred_check_branch
      %24 = sbr.rel (0) target = $region13
    $region12: #{feed_forward_layer.1} parent=1 // pred_region
      _
    $region13: #{feed_forward_layer.1} parent=1 // pred_fallthru
      _
    // Predicated region
    $region14: #{feed_forward_layer.1} parent=1 // pred_check
      _
    $region15: #{feed_forward_layer.1} parent=1 // pred_check_branch
      %26 = sbr.rel (0) target = $region17
    $region16: #{feed_forward_layer.1} parent=1 // pred_region
      %27 = dma.done [#allocation3], 1024
    $region17: #{feed_forward_layer.1} parent=1 // pred_fallthru
      _
    %v29 = vld [vmem:[%s0] sm:$0xff]
    %v30 = vld [vmem:[%s0 + $0x8] sm:$0xff]
    %v31 = vpack.c.bf16 %v30, %v29
    %v32 = vld [vmem:[#allocation2] sm:$0xf]
    %v33 = vld [vmem:[#allocation2 + $0x4] sm:$0xf]
    %v34 = vld [vmem:[#allocation2 + $0x8] sm:$0xf]
    %v35 = vld [vmem:[#allocation2 + $0xc] sm:$0xf]
    %v36 = vld [vmem:[#allocation2 + $0x10] sm:$0xf]
    %v37 = vld [vmem:[#allocation2 + $0x14] sm:$0xf]
    %v38 = vld [vmem:[#allocation2 + $0x18] sm:$0xf]
    %v39 = vld [vmem:[#allocation2 + $0x1c] sm:$0xf]
    %v40 = vld [vmem:[#allocation2 + $0x20] sm:$0xf]
    %v41 = vld [vmem:[#allocation2 + $0x24] sm:$0xf]
    %v42 = vld [vmem:[#allocation2 + $0x28] sm:$0xf]
    %v43 = vld [vmem:[#allocation2 + $0x2c] sm:$0xf]
    %v44 = vld [vmem:[#allocation2 + $0x30] sm:$0xf]
    %v45 = vld [vmem:[#allocation2 + $0x34] sm:$0xf]
    %v46 = vld [vmem:[#allocation2 + $0x38] sm:$0xf]
    %v47 = vld [vmem:[#allocation2 + $0x3c] sm:$0xf]
    %v48 = vld [vmem:[%s2] sm:$0x1]
    %v50 = vlaneseq
    %v51 = vshrl.u32 %v50, 7
    %v52 = vsub.s32 0, %v51
    %v53 = vrot.slane %v48, %v52
    %v71 = vunpack.c.l.b16 %v32
    %v72 = vunpack.c.l.b16 %v33
    %v73 = vunpack.c.l.b16 %v34
    %v74 = vunpack.c.l.b16 %v35
    %v75 = vunpack.c.l.b16 %v36
    %v76 = vunpack.c.l.b16 %v37
    %v77 = vunpack.c.l.b16 %v38
    %v78 = vunpack.c.l.b16 %v39
    %v79 = vunpack.c.l.b16 %v40
    %v80 = vunpack.c.l.b16 %v41
    %v81 = vunpack.c.l.b16 %v42
    %v82 = vunpack.c.l.b16 %v43
    %v83 = vunpack.c.l.b16 %v44
    %v84 = vunpack.c.l.b16 %v45
    %v85 = vunpack.c.l.b16 %v46
    %v86 = vunpack.c.l.b16 %v47
    %v87 = vpack.c.b16 %v72, %v71
    %v88 = vpack.c.b16 %v74, %v73
    %v89 = vpack.c.b16 %v76, %v75
    %v90 = vpack.c.b16 %v78, %v77
    %v91 = vpack.c.b16 %v80, %v79
    %v92 = vpack.c.b16 %v82, %v81
    %v93 = vpack.c.b16 %v84, %v83
    %v94 = vpack.c.b16 %v86, %v85
    %103 = vmatprep.subr.bf16.mxu0 0
    %104 = vmatpush1.bf16.msra.mxu0 %v94
    %105 = vmatprep.subr.bf16.mxu0 0
    %106 = vmatpush1.bf16.msra.mxu0 %v93
    %107 = vmatprep.subr.bf16.mxu0 0
    %108 = vmatpush1.bf16.msra.mxu0 %v92
    %109 = vmatprep.subr.bf16.mxu0 0
    %110 = vmatpush1.bf16.msra.mxu0 %v91
    %111 = vmatprep.subr.bf16.mxu0 0
    %112 = vmatpush1.bf16.msra.mxu0 %v90
    %113 = vmatprep.subr.bf16.mxu0 0
    %114 = vmatpush1.bf16.msra.mxu0 %v89
    %115 = vmatprep.subr.bf16.mxu0 0
    %116 = vmatpush1.bf16.msra.mxu0 %v88
    %117 = vmatprep.subr.bf16.mxu0 0
    %118 = vmatpush1.bf16.msra.mxu0 %v87
    %119 = vmatprep.subr.bf16.mxu0 0
    %120 = vmatpush2.bf16.msra.mxu0 0
    %121 = vmatprep.subr.bf16.mxu0 0
    %122 = vmatpush2.bf16.msra.mxu0 0
    %123 = vmatprep.subr.bf16.mxu0 0
    %124 = vmatpush2.bf16.msra.mxu0 0
    %125 = vmatprep.subr.bf16.mxu0 0
    %126 = vmatpush2.bf16.msra.mxu0 0
    %127 = vmatprep.subr.bf16.mxu0 0
    %128 = vmatpush2.bf16.msra.mxu0 0
    %129 = vmatprep.subr.bf16.mxu0 0
    %130 = vmatpush2.bf16.msra.mxu0 0
    %131 = vmatprep.subr.bf16.mxu0 0
    %132 = vmatpush2.bf16.msra.mxu0 0
    %133 = vmatprep.subr.bf16.mxu0 0
    %134 = vmatpush2.bf16.msra.mxu0 0
    %135 = vmatprep.mubr.bf16.mxu0 0
    %136 = vmatmul.mubr.bf16.gmra.mxu0 %v31
    %v137 = vpop.f32.mrf.mxu0
    %v138 = vadd.f32 %v53, %v137
    %v139 = vpop.f32.mrf.mxu0
    %v140 = vpop.f32.mrf.mxu0
    %v141 = vadd.f32 %v53, %v140
    %v142 = vpop.f32.mrf.mxu0
    %143 = vdwg.mxu0
    %v144 = vmax.f32 %v138, 0.0
    %v145 = vmax.f32 %v141, 0.0
    %146 = vst [vmem:[%s3] sm:$0xff] %v144
    %147 = vst [vmem:[%s3 + $0x8] sm:$0xff] %v145
    // Predicated region
    $region18: #{feed_forward_layer.1} parent=1 // pred_check
      _
    $region19: #{feed_forward_layer.1} parent=1 // pred_check_branch
      %149 = sbr.rel (0) target = $region21
    $region20: #{feed_forward_layer.1} parent=1 // pred_region
      _
    $region21: #{feed_forward_layer.1} parent=1 // pred_fallthru
      _
    // Predicated region
    $region22: #{feed_forward_layer.1} parent=1 // pred_check
      _
    $region23: #{feed_forward_layer.1} parent=1 // pred_check_branch
      %151 = sbr.rel (0) target = $region25
    $region24: #{feed_forward_layer.1} parent=1 // pred_region
      _
    $region25: #{feed_forward_layer.1} parent=1 // pred_fallthru
      _
    %152 = vsyncpa [#allocation3], 1

</llo_original>
